<compile_context>
chip_gen: v5e
topology: v5e:2x2
jax: 0.10.0
libtpu: 0.0.40
codegen_flags: <defaults>
</compile_context>

<pallas_src>
import math
import functools

import jax
import jax.numpy as jnp
from jax import lax
from jax.experimental import pallas as pl
from jax.experimental.pallas import tpu as pltpu

_MASK_VALUE = -1e30                      # large finite negative (no inf-inf NaNs)
_VMEM_LIMIT = 48 * 1024 * 1024           # scoped VMEM; headroom on v7x (64 MiB)

# Defaults per review (clamped to S): v6e/v7x want tq=256, tkv=512, ts=256.
_BLOCK_Q = 256
_BLOCK_KV = 512
_BLOCK_S = 256


# ---------------------------------------------------------------------------
# Kernel 1: fused Q/K/V projection, grid (B, S-tiles).  One wide GEMM; per-head
#           slabs are written with static lane slices.  Scale folded into Wq.
# ---------------------------------------------------------------------------
def _qkv_proj_kernel(x_ref, w_ref, b_ref, q_ref, k_ref, v_ref, *,
                     num_heads, d_key, d_value):
    x = x_ref[...]                                               # (ts, D) bf16
    y = jnp.dot(x, w_ref[...], preferred_element_type=jnp.float32) + b_ref[...]
    off_k = num_heads * d_key
    off_v = 2 * num_heads * d_key
    for h in range(num_heads):                                   # static unroll
        q_ref[h] = y[:, h * d_key:(h + 1) * d_key].astype(q_ref.dtype)
        k_ref[h] = y[:, off_k + h * d_key: off_k + (h + 1) * d_key].astype(k_ref.dtype)
        v_ref[h] = y[:, off_v + h * d_value: off_v + (h + 1) * d_value].astype(v_ref.dtype)


# ---------------------------------------------------------------------------
# Kernel 2: flash attention + fused output projection.
#           grid (B, Q-tiles, H, KV-tiles); online softmax; Wo resident.
# ---------------------------------------------------------------------------
def _flash_outproj_kernel(q_ref, k_ref, v_ref, wo_ref, bo_ref, o_ref,
                          m_sc, l_sc, acc_sc, oacc_sc, *, tq, tkv, causal):
    qi = pl.program_id(1)
    h = pl.program_id(2)
    ki = pl.program_id(3)
    nh = pl.num_programs(2)
    nk = pl.num_programs(3)
    q_start = qi * tq
    kv_start = ki * tkv

    @pl.when(ki == 0)
    def _init_flash():
        m_sc[...] = jnp.full(m_sc.shape, _MASK_VALUE, m_sc.dtype)
        l_sc[...] = jnp.zeros(l_sc.shape, l_sc.dtype)
        acc_sc[...] = jnp.zeros(acc_sc.shape, acc_sc.dtype)

    @pl.when(jnp.logical_and(h == 0, ki == 0))
    def _init_out():
        oacc_sc[...] = jnp.zeros(oacc_sc.shape, oacc_sc.dtype)

    def _compute(masked):
        q = q_ref[...]                                           # (tq, dk)  bf16, pre-scaled
        k = k_ref[...]                                           # (tkv, dk) bf16
        v = v_ref[...]                                           # (tkv, dv) bf16
        s = jnp.einsum('qd,kd->qk', q, k, preferred_element_type=jnp.float32)
        if masked:
            row = q_start + lax.broadcasted_iota(jnp.int32, (tq, tkv), 0)
            col = kv_start + lax.broadcasted_iota(jnp.int32, (tq, tkv), 1)
            s = jnp.where(row >= col, s, _MASK_VALUE)
        m_prev = m_sc[...]
        m_new = jnp.maximum(m_prev, jnp.max(s, axis=-1, keepdims=True))
        alpha = jnp.exp(m_prev - m_new)
        p = jnp.exp(s - m_new)                                   # f32
        l_sc[...] = alpha * l_sc[...] + jnp.sum(p, axis=-1, keepdims=True)
        acc_sc[...] = alpha * acc_sc[...] + jnp.dot(
            p.astype(v.dtype), v, preferred_element_type=jnp.float32)
        m_sc[...] = m_new

    if causal:
        q_last = q_start + tq - 1
        kv_last = kv_start + tkv - 1
        fully_visible = q_start >= kv_last          # whole tile below/on diagonal -> no mask
        on_diagonal = jnp.logical_and(kv_last > q_start, kv_start <= q_last)

        @pl.when(fully_visible)
        def _():
            _compute(masked=False)

        @pl.when(on_diagonal)
        def _():
            _compute(masked=True)
        # tiles fully above the diagonal: compute skipped; K/V index_map is clamped
        # in the wrapper so their DMAs are no-ops too.
    else:
        _compute(masked=False)

    @pl.when(ki == nk - 1)
    def _head_finalize():
        inv = pl.reciprocal(l_sc[...], approx=True)              # EUP slot, ~free
        attn = (acc_sc[...] * inv).astype(v_ref.dtype)           # (tq, dv) bf16
        oacc_sc[...] += jnp.dot(attn, wo_ref[h],                 # Wo_h resident in VMEM
                                preferred_element_type=jnp.float32)

    @pl.when(jnp.logical_and(h == nh - 1, ki == nk - 1))
    def _finalize():
        o_ref[...] = (oacc_sc[...] + bo_ref[...]).astype(o_ref.dtype)


# ---------------------------------------------------------------------------
# Wrapper
# ---------------------------------------------------------------------------
def multi_head_attention(x, params, *, num_heads, d_key, d_value, causal,
                         block_q=_BLOCK_Q, block_kv=_BLOCK_KV, block_s=_BLOCK_S,
                         compute_dtype=jnp.bfloat16):
    """x: (B, S, d_model) float32.  params: weights (in,out) / biases (1,out)."""
    B, S, D = x.shape
    H, dk, dv = num_heads, d_key, d_value
    n_tot = H * (2 * dk + dv)

    tq = min(block_q, S)
    tkv = min(block_kv, S)
    ts = min(block_s, S)
    assert S % tq == 0 and S % tkv == 0 and S % ts == 0, "S must divide tile sizes"

    # ---- one-time weight fusion / re-layout (outside the kernels) ----
    scale = 1.0 / math.sqrt(dk)                      # folded into Wq/bq (f32, then cast)
    wqkv = jnp.concatenate([params["wq"] * scale, params["wk"], params["wv"]],
                           axis=1).astype(compute_dtype)          # (D, n_tot)
    bqkv = jnp.concatenate([params["bq"] * scale, params["bk"], params["bv"]],
                           axis=1).astype(jnp.float32)            # (1, n_tot)
    wo_h = params["wo"].reshape(H, dv, D).astype(compute_dtype)   # (H, dv, D)
    bo = params["bo"].astype(jnp.float32)                         # (1, D)
    xc = x.astype(compute_dtype)

    # ---- kernel 1: fused QKV projection -> (B, H, S, d_head) bf16 ----
    qkv_kernel = functools.partial(_qkv_proj_kernel, num_heads=H,
                                   d_key=dk, d_value=dv)
    q, k, v = pl.pallas_call(
        qkv_kernel,
        out_shape=(jax.ShapeDtypeStruct((B, H, S, dk), compute_dtype),
                   jax.ShapeDtypeStruct((B, H, S, dk), compute_dtype),
                   jax.ShapeDtypeStruct((B, H, S, dv), compute_dtype)),
        grid_spec=pltpu.PrefetchScalarGridSpec(
            num_scalar_prefetch=0,
            grid=(B, S // ts),
            in_specs=[
                pl.BlockSpec((None, ts, D), lambda b, si: (b, si, 0)),    # x (read once)
                pl.BlockSpec((D, n_tot), lambda b, si: (0, 0)),           # fused Wqkv, resident
                pl.BlockSpec((1, n_tot), lambda b, si: (0, 0)),           # fused bias, resident
            ],
            out_specs=[
                pl.BlockSpec((None, H, ts, dk), lambda b, si: (b, 0, si, 0)),
                pl.BlockSpec((None, H, ts, dk), lambda b, si: (b, 0, si, 0)),
                pl.BlockSpec((None, H, ts, dv), lambda b, si: (b, 0, si, 0)),
            ],
        ),
        compiler_params=pltpu.CompilerParams(
            dimension_semantics=("parallel", "parallel"),
            vmem_limit_bytes=_VMEM_LIMIT),
    )(xc, wqkv, bqkv)

    # ---- kernel 2: flash attention + output projection -> (B, S, D) ----
    if causal:
        def kv_index_map(b, qi, h, ki):
            # Clamp to the last block that intersects this Q tile: skipped tiles'
            # DMAs become no-ops (block index unchanged along the inner axis).
            last = (qi * tq + tq - 1) // tkv
            return (b, h, jnp.minimum(ki, last), 0)
    else:
        def kv_index_map(b, qi, h, ki):
            return (b, h, ki, 0)

    attn_kernel = functools.partial(_flash_outproj_kernel, tq=tq, tkv=tkv,
                                    causal=causal)
    out = pl.pallas_call(
        attn_kernel,
        out_shape=jax.ShapeDtypeStruct((B, S, D), x.dtype),
        grid_spec=pltpu.PrefetchScalarGridSpec(
            num_scalar_prefetch=0,
            grid=(B, S // tq, H, S // tkv),
            in_specs=[
                pl.BlockSpec((None, None, tq, dk),
                             lambda b, qi, h, ki: (b, h, qi, 0)),          # Q
                pl.BlockSpec((None, None, tkv, dk), kv_index_map),         # K
                pl.BlockSpec((None, None, tkv, dv), kv_index_map),         # V
                pl.BlockSpec((H, dv, D), lambda b, qi, h, ki: (0, 0, 0)),  # Wo, resident
                pl.BlockSpec((1, D), lambda b, qi, h, ki: (0, 0)),         # bo, resident
            ],
            out_specs=pl.BlockSpec((None, tq, D),
                                   lambda b, qi, h, ki: (b, qi, 0)),
            scratch_shapes=[pltpu.VMEM((tq, 1), jnp.float32),   # running max m
                            pltpu.VMEM((tq, 1), jnp.float32),   # running sum l
                            pltpu.VMEM((tq, dv), jnp.float32),  # per-head attention acc
                            pltpu.VMEM((tq, D), jnp.float32)],  # out-projection acc
        ),
        compiler_params=pltpu.CompilerParams(
            dimension_semantics=("parallel", "parallel", "arbitrary", "arbitrary"),
            vmem_limit_bytes=_VMEM_LIMIT),
    )(q, k, v, wo_h, bo)

    return out


# ---------------------------------------------------------------------------
# Pure-JAX reference (f32) mirroring the PyTorch forward (eval mode)
# ---------------------------------------------------------------------------
def _reference(x, params, *, num_heads, d_key, d_value, causal):
    B, S, D = x.shape
    q = x @ params["wq"] + params["bq"]
    k = x @ params["wk"] + params["bk"]
    v = x @ params["wv"] + params["bv"]
    q = q.reshape(B, S, num_heads, d_key).transpose(0, 2, 1, 3)
    k = k.reshape(B, S, num_heads, d_key).transpose(0, 2, 1, 3)
    v = v.reshape(B, S, num_heads, d_value).transpose(0, 2, 1, 3)
    scores = jnp.einsum('bhqd,bhkd->bhqk', q, k) / math.sqrt(d_key)
    if causal:
        mask = jnp.tril(jnp.ones((S, S), dtype=bool))
        scores = jnp.where(mask[None, None], scores, -jnp.inf)
    attn = jax.nn.softmax(scores, axis=-1)
    out = jnp.einsum('bhqk,bhkd->bhqd', attn, v)
    out = out.transpose(0, 2, 1, 3).reshape(B, S, num_heads * d_value)
    return out @ params["wo"] + params["bo"]


def init_params(key, d_model, d_key, d_value, num_heads):
    """PyTorch-Linear-style init: U(-1/sqrt(fan_in), 1/sqrt(fan_in)).
    Weights stored transposed: (in_features, out_features); biases as (1, out)."""
    dko, dvo = d_key * num_heads, d_value * num_heads
    ks = jax.random.split(key, 8)

    def lin(kw, kb, fan_in, fan_out):
        bound = 1.0 / math.sqrt(fan_in)
        w = jax.random.uniform(kw, (fan_in, fan_out), jnp.float32, -bound, bound)
        b = jax.random.uniform(kb, (1, fan_out), jnp.float32, -bound, bound)
        return w, b

    wq, bq = lin(ks[0], ks[1], d_model, dko)
    wk, bk = lin(ks[2], ks[3], d_model, dko)
    wv, bv = lin(ks[4], ks[5], d_model, dvo)
    wo, bo = lin(ks[6], ks[7], dvo, d_model)
    return dict(wq=wq, bq=bq, wk=wk, bk=bk, wv=wv, bv=bv, wo=wo, bo=bo)


if __name__ == "__main__":
    # Small, shape-consistent example: batch=2, seq=8, d_model=32, 4 heads,
    # d_key=d_value=16, causal self-attention.
    B, S, D = 2, 8, 32
    num_heads, d_key, d_value = 4, 16, 16
    causal = True

    key = jax.random.PRNGKey(0)
    kx, kp = jax.random.split(key)
    x = jax.random.normal(kx, (B, S, D), dtype=jnp.float32)
    params = init_params(kp, D, d_key, d_value, num_heads)

    out = multi_head_attention(x, params, num_heads=num_heads, d_key=d_key,
                               d_value=d_value, causal=causal)
    out = jax.block_until_ready(out)

    ref = _reference(x, params, num_heads=num_heads, d_key=d_key,
                     d_value=d_value, causal=causal)
    assert out.shape == (B, S, D)
    # bf16 operands with f32 accumulation -> looser tolerance vs f32 reference.
    assert jnp.allclose(out, ref, atol=5e-2, rtol=5e-2), "mismatch vs reference"

    print("KERNEL_OK")
</pallas_src>

<mosaic_0001>
module attributes {stable_mosaic.version = 11 : i64} {
  func.func @_qkv_proj_kernel(%arg0: i32, %arg1: i32, %arg2: memref<1x8x32xbf16, #tpu.memory_space<vmem>>, %arg3: memref<32x192xbf16, #tpu.memory_space<vmem>>, %arg4: memref<1x192xf32, #tpu.memory_space<vmem>>, %arg5: memref<1x4x8x16xbf16, #tpu.memory_space<vmem>>, %arg6: memref<1x4x8x16xbf16, #tpu.memory_space<vmem>>, %arg7: memref<1x4x8x16xbf16, #tpu.memory_space<vmem>>) attributes {dimension_semantics = [#tpu.dimension_semantics<parallel>, #tpu.dimension_semantics<parallel>], iteration_bounds = array<i64: 2, 1>, scalar_prefetch = 0 : i64, scratch_operands = 0 : i64, tpu.core_type = #tpu.core_type<tc>, window_params = [{transform_indices = @transform_0, window_bounds = array<i64: 1, 8, 32>}, {pipeline_mode = #tpu.pipeline_mode<synchronous>, transform_indices = @transform_1, window_bounds = array<i64: 32, 192>}, {pipeline_mode = #tpu.pipeline_mode<synchronous>, transform_indices = @transform_2, window_bounds = array<i64: 1, 192>}, {transform_indices = @transform_3, window_bounds = array<i64: 1, 4, 8, 16>}, {transform_indices = @transform_4, window_bounds = array<i64: 1, 4, 8, 16>}, {transform_indices = @transform_5, window_bounds = array<i64: 1, 4, 8, 16>}]} {
    %c0 = arith.constant 0 : index
    %c0_0 = arith.constant 0 : index
    %c0_1 = arith.constant 0 : index
    %0 = vector.load %arg2[%c0, %c0_0, %c0_1] : memref<1x8x32xbf16, #tpu.memory_space<vmem>>, vector<1x8x32xbf16>
    %1 = vector.shape_cast %0 : vector<1x8x32xbf16> to vector<8x32xbf16>
    %c0_2 = arith.constant 0 : index
    %c0_3 = arith.constant 0 : index
    %2 = vector.load %arg3[%c0_2, %c0_3] : memref<32x192xbf16, #tpu.memory_space<vmem>>, vector<32x192xbf16>
    %cst = arith.constant dense<0.000000e+00> : vector<8x192xf32>
    %3 = tpu.matmul %1, %2, %cst {dimension_numbers = #tpu.dot_dimension_numbers<[1], [0], [0], [1], [0, 0, 1, 1], [], []>} : vector<8x32xbf16>, vector<32x192xbf16>, vector<8x192xf32> -> vector<8x192xf32>
    %c0_4 = arith.constant 0 : index
    %c0_5 = arith.constant 0 : index
    %4 = vector.load %arg4[%c0_4, %c0_5] : memref<1x192xf32, #tpu.memory_space<vmem>>, vector<1x192xf32>
    %5 = vector.broadcast %4 : vector<1x192xf32> to vector<8x192xf32>
    %6 = arith.addf %3, %5 : vector<8x192xf32>
    %7 = vector.extract_strided_slice %6 {offsets = [0, 0], sizes = [8, 16], strides = [1, 1]} : vector<8x192xf32> to vector<8x16xf32>
    %8 = arith.truncf %7 : vector<8x16xf32> to vector<8x16xbf16>
    %c0_6 = arith.constant 0 : index
    %c0_7 = arith.constant 0 : index
    %c0_8 = arith.constant 0 : index
    %c0_9 = arith.constant 0 : index
    %9 = vector.load %arg5[%c0_6, %c0_7, %c0_8, %c0_9] : memref<1x4x8x16xbf16, #tpu.memory_space<vmem>>, vector<1x1x8x16xbf16>
    %10 = vector.shape_cast %9 : vector<1x1x8x16xbf16> to vector<8x16xbf16>
    %11 = vector.shape_cast %8 : vector<8x16xbf16> to vector<1x1x8x16xbf16>
    tpu.vector_store %arg5[%c0_6, %c0_7, %c0_8, %c0_9], %11 {strides = array<i32>} : memref<1x4x8x16xbf16, #tpu.memory_space<vmem>>, vector<1x1x8x16xbf16>,
    %12 = vector.extract_strided_slice %6 {offsets = [0, 64], sizes = [8, 16], strides = [1, 1]} : vector<8x192xf32> to vector<8x16xf32>
    %13 = arith.truncf %12 : vector<8x16xf32> to vector<8x16xbf16>
    %c0_10 = arith.constant 0 : index
    %c0_11 = arith.constant 0 : index
    %c0_12 = arith.constant 0 : index
    %c0_13 = arith.constant 0 : index
    %14 = vector.load %arg6[%c0_10, %c0_11, %c0_12, %c0_13] : memref<1x4x8x16xbf16, #tpu.memory_space<vmem>>, vector<1x1x8x16xbf16>
    %15 = vector.shape_cast %14 : vector<1x1x8x16xbf16> to vector<8x16xbf16>
    %16 = vector.shape_cast %13 : vector<8x16xbf16> to vector<1x1x8x16xbf16>
    tpu.vector_store %arg6[%c0_10, %c0_11, %c0_12, %c0_13], %16 {strides = array<i32>} : memref<1x4x8x16xbf16, #tpu.memory_space<vmem>>, vector<1x1x8x16xbf16>,
    %17 = vector.extract_strided_slice %6 {offsets = [0, 128], sizes = [8, 16], strides = [1, 1]} : vector<8x192xf32> to vector<8x16xf32>
    %18 = arith.truncf %17 : vector<8x16xf32> to vector<8x16xbf16>
    %c0_14 = arith.constant 0 : index
    %c0_15 = arith.constant 0 : index
    %c0_16 = arith.constant 0 : index
    %c0_17 = arith.constant 0 : index
    %19 = vector.load %arg7[%c0_14, %c0_15, %c0_16, %c0_17] : memref<1x4x8x16xbf16, #tpu.memory_space<vmem>>, vector<1x1x8x16xbf16>
    %20 = vector.shape_cast %19 : vector<1x1x8x16xbf16> to vector<8x16xbf16>
    %21 = vector.shape_cast %18 : vector<8x16xbf16> to vector<1x1x8x16xbf16>
    tpu.vector_store %arg7[%c0_14, %c0_15, %c0_16, %c0_17], %21 {strides = array<i32>} : memref<1x4x8x16xbf16, #tpu.memory_space<vmem>>, vector<1x1x8x16xbf16>,
    %22 = vector.extract_strided_slice %6 {offsets = [0, 16], sizes = [8, 16], strides = [1, 1]} : vector<8x192xf32> to vector<8x16xf32>
    %23 = arith.truncf %22 : vector<8x16xf32> to vector<8x16xbf16>
    %c0_18 = arith.constant 0 : index
    %c1 = arith.constant 1 : index
    %c0_19 = arith.constant 0 : index
    %c0_20 = arith.constant 0 : index
    %24 = vector.load %arg5[%c0_18, %c1, %c0_19, %c0_20] : memref<1x4x8x16xbf16, #tpu.memory_space<vmem>>, vector<1x1x8x16xbf16>
    %25 = vector.shape_cast %24 : vector<1x1x8x16xbf16> to vector<8x16xbf16>
    %26 = vector.shape_cast %23 : vector<8x16xbf16> to vector<1x1x8x16xbf16>
    tpu.vector_store %arg5[%c0_18, %c1, %c0_19, %c0_20], %26 {strides = array<i32>} : memref<1x4x8x16xbf16, #tpu.memory_space<vmem>>, vector<1x1x8x16xbf16>,
    %27 = vector.extract_strided_slice %6 {offsets = [0, 80], sizes = [8, 16], strides = [1, 1]} : vector<8x192xf32> to vector<8x16xf32>
    %28 = arith.truncf %27 : vector<8x16xf32> to vector<8x16xbf16>
    %c0_21 = arith.constant 0 : index
    %c1_22 = arith.constant 1 : index
    %c0_23 = arith.constant 0 : index
    %c0_24 = arith.constant 0 : index
    %29 = vector.load %arg6[%c0_21, %c1_22, %c0_23, %c0_24] : memref<1x4x8x16xbf16, #tpu.memory_space<vmem>>, vector<1x1x8x16xbf16>
    %30 = vector.shape_cast %29 : vector<1x1x8x16xbf16> to vector<8x16xbf16>
    %31 = vector.shape_cast %28 : vector<8x16xbf16> to vector<1x1x8x16xbf16>
    tpu.vector_store %arg6[%c0_21, %c1_22, %c0_23, %c0_24], %31 {strides = array<i32>} : memref<1x4x8x16xbf16, #tpu.memory_space<vmem>>, vector<1x1x8x16xbf16>,
    %32 = vector.extract_strided_slice %6 {offsets = [0, 144], sizes = [8, 16], strides = [1, 1]} : vector<8x192xf32> to vector<8x16xf32>
    %33 = arith.truncf %32 : vector<8x16xf32> to vector<8x16xbf16>
    %c0_25 = arith.constant 0 : index
    %c1_26 = arith.constant 1 : index
    %c0_27 = arith.constant 0 : index
    %c0_28 = arith.constant 0 : index
    %34 = vector.load %arg7[%c0_25, %c1_26, %c0_27, %c0_28] : memref<1x4x8x16xbf16, #tpu.memory_space<vmem>>, vector<1x1x8x16xbf16>
    %35 = vector.shape_cast %34 : vector<1x1x8x16xbf16> to vector<8x16xbf16>
    %36 = vector.shape_cast %33 : vector<8x16xbf16> to vector<1x1x8x16xbf16>
    tpu.vector_store %arg7[%c0_25, %c1_26, %c0_27, %c0_28], %36 {strides = array<i32>} : memref<1x4x8x16xbf16, #tpu.memory_space<vmem>>, vector<1x1x8x16xbf16>,
    %37 = vector.extract_strided_slice %6 {offsets = [0, 32], sizes = [8, 16], strides = [1, 1]} : vector<8x192xf32> to vector<8x16xf32>
    %38 = arith.truncf %37 : vector<8x16xf32> to vector<8x16xbf16>
    %c0_29 = arith.constant 0 : index
    %c2 = arith.constant 2 : index
    %c0_30 = arith.constant 0 : index
    %c0_31 = arith.constant 0 : index
    %39 = vector.load %arg5[%c0_29, %c2, %c0_30, %c0_31] : memref<1x4x8x16xbf16, #tpu.memory_space<vmem>>, vector<1x1x8x16xbf16>
    %40 = vector.shape_cast %39 : vector<1x1x8x16xbf16> to vector<8x16xbf16>
    %41 = vector.shape_cast %38 : vector<8x16xbf16> to vector<1x1x8x16xbf16>
    tpu.vector_store %arg5[%c0_29, %c2, %c0_30, %c0_31], %41 {strides = array<i32>} : memref<1x4x8x16xbf16, #tpu.memory_space<vmem>>, vector<1x1x8x16xbf16>,
    %42 = vector.extract_strided_slice %6 {offsets = [0, 96], sizes = [8, 16], strides = [1, 1]} : vector<8x192xf32> to vector<8x16xf32>
    %43 = arith.truncf %42 : vector<8x16xf32> to vector<8x16xbf16>
    %c0_32 = arith.constant 0 : index
    %c2_33 = arith.constant 2 : index
    %c0_34 = arith.constant 0 : index
    %c0_35 = arith.constant 0 : index
    %44 = vector.load %arg6[%c0_32, %c2_33, %c0_34, %c0_35] : memref<1x4x8x16xbf16, #tpu.memory_space<vmem>>, vector<1x1x8x16xbf16>
    %45 = vector.shape_cast %44 : vector<1x1x8x16xbf16> to vector<8x16xbf16>
    %46 = vector.shape_cast %43 : vector<8x16xbf16> to vector<1x1x8x16xbf16>
    tpu.vector_store %arg6[%c0_32, %c2_33, %c0_34, %c0_35], %46 {strides = array<i32>} : memref<1x4x8x16xbf16, #tpu.memory_space<vmem>>, vector<1x1x8x16xbf16>,
    %47 = vector.extract_strided_slice %6 {offsets = [0, 160], sizes = [8, 16], strides = [1, 1]} : vector<8x192xf32> to vector<8x16xf32>
    %48 = arith.truncf %47 : vector<8x16xf32> to vector<8x16xbf16>
    %c0_36 = arith.constant 0 : index
    %c2_37 = arith.constant 2 : index
    %c0_38 = arith.constant 0 : index
    %c0_39 = arith.constant 0 : index
    %49 = vector.load %arg7[%c0_36, %c2_37, %c0_38, %c0_39] : memref<1x4x8x16xbf16, #tpu.memory_space<vmem>>, vector<1x1x8x16xbf16>
    %50 = vector.shape_cast %49 : vector<1x1x8x16xbf16> to vector<8x16xbf16>
    %51 = vector.shape_cast %48 : vector<8x16xbf16> to vector<1x1x8x16xbf16>
    tpu.vector_store %arg7[%c0_36, %c2_37, %c0_38, %c0_39], %51 {strides = array<i32>} : memref<1x4x8x16xbf16, #tpu.memory_space<vmem>>, vector<1x1x8x16xbf16>,
    %52 = vector.extract_strided_slice %6 {offsets = [0, 48], sizes = [8, 16], strides = [1, 1]} : vector<8x192xf32> to vector<8x16xf32>
    %53 = arith.truncf %52 : vector<8x16xf32> to vector<8x16xbf16>
    %c0_40 = arith.constant 0 : index
    %c3 = arith.constant 3 : index
    %c0_41 = arith.constant 0 : index
    %c0_42 = arith.constant 0 : index
    %54 = vector.load %arg5[%c0_40, %c3, %c0_41, %c0_42] : memref<1x4x8x16xbf16, #tpu.memory_space<vmem>>, vector<1x1x8x16xbf16>
    %55 = vector.shape_cast %54 : vector<1x1x8x16xbf16> to vector<8x16xbf16>
    %56 = vector.shape_cast %53 : vector<8x16xbf16> to vector<1x1x8x16xbf16>
    tpu.vector_store %arg5[%c0_40, %c3, %c0_41, %c0_42], %56 {strides = array<i32>} : memref<1x4x8x16xbf16, #tpu.memory_space<vmem>>, vector<1x1x8x16xbf16>,
    %57 = vector.extract_strided_slice %6 {offsets = [0, 112], sizes = [8, 16], strides = [1, 1]} : vector<8x192xf32> to vector<8x16xf32>
    %58 = arith.truncf %57 : vector<8x16xf32> to vector<8x16xbf16>
    %c0_43 = arith.constant 0 : index
    %c3_44 = arith.constant 3 : index
    %c0_45 = arith.constant 0 : index
    %c0_46 = arith.constant 0 : index
    %59 = vector.load %arg6[%c0_43, %c3_44, %c0_45, %c0_46] : memref<1x4x8x16xbf16, #tpu.memory_space<vmem>>, vector<1x1x8x16xbf16>
    %60 = vector.shape_cast %59 : vector<1x1x8x16xbf16> to vector<8x16xbf16>
    %61 = vector.shape_cast %58 : vector<8x16xbf16> to vector<1x1x8x16xbf16>
    tpu.vector_store %arg6[%c0_43, %c3_44, %c0_45, %c0_46], %61 {strides = array<i32>} : memref<1x4x8x16xbf16, #tpu.memory_space<vmem>>, vector<1x1x8x16xbf16>,
    %62 = vector.extract_strided_slice %6 {offsets = [0, 176], sizes = [8, 16], strides = [1, 1]} : vector<8x192xf32> to vector<8x16xf32>
    %63 = arith.truncf %62 : vector<8x16xf32> to vector<8x16xbf16>
    %c0_47 = arith.constant 0 : index
    %c3_48 = arith.constant 3 : index
    %c0_49 = arith.constant 0 : index
    %c0_50 = arith.constant 0 : index
    %64 = vector.load %arg7[%c0_47, %c3_48, %c0_49, %c0_50] : memref<1x4x8x16xbf16, #tpu.memory_space<vmem>>, vector<1x1x8x16xbf16>
    %65 = vector.shape_cast %64 : vector<1x1x8x16xbf16> to vector<8x16xbf16>
    %66 = vector.shape_cast %63 : vector<8x16xbf16> to vector<1x1x8x16xbf16>
    tpu.vector_store %arg7[%c0_47, %c3_48, %c0_49, %c0_50], %66 {strides = array<i32>} : memref<1x4x8x16xbf16, #tpu.memory_space<vmem>>, vector<1x1x8x16xbf16>,
    return
  }
  func.func @transform_0(%arg0: i32, %arg1: i32) -> (i32, i32, i32) {
    %c0_i32 = arith.constant 0 : i32
    %c0_i32_0 = arith.constant 0 : i32
    return %arg0, %arg1, %c0_i32 : i32, i32, i32
  }
  func.func @transform_1(%arg0: i32, %arg1: i32) -> (i32, i32) {
    %c0_i32 = arith.constant 0 : i32
    %c0_i32_0 = arith.constant 0 : i32
    %c0_i32_1 = arith.constant 0 : i32
    return %c0_i32, %c0_i32_0 : i32, i32
  }
  func.func @transform_2(%arg0: i32, %arg1: i32) -> (i32, i32) {
    %c0_i32 = arith.constant 0 : i32
    %c0_i32_0 = arith.constant 0 : i32
    %c0_i32_1 = arith.constant 0 : i32
    return %c0_i32, %c0_i32_0 : i32, i32
  }
  func.func @transform_3(%arg0: i32, %arg1: i32) -> (i32, i32, i32, i32) {
    %c0_i32 = arith.constant 0 : i32
    %c0_i32_0 = arith.constant 0 : i32
    %c0_i32_1 = arith.constant 0 : i32
    return %arg0, %c0_i32, %arg1, %c0_i32_0 : i32, i32, i32, i32
  }
  func.func @transform_4(%arg0: i32, %arg1: i32) -> (i32, i32, i32, i32) {
    %c0_i32 = arith.constant 0 : i32
    %c0_i32_0 = arith.constant 0 : i32
    %c0_i32_1 = arith.constant 0 : i32
    return %arg0, %c0_i32, %arg1, %c0_i32_0 : i32, i32, i32, i32
  }
  func.func @transform_5(%arg0: i32, %arg1: i32) -> (i32, i32, i32, i32) {
    %c0_i32 = arith.constant 0 : i32
    %c0_i32_0 = arith.constant 0 : i32
    %c0_i32_1 = arith.constant 0 : i32
    return %arg0, %c0_i32, %arg1, %c0_i32_0 : i32, i32, i32, i32
  }
}

</mosaic_0001>

<llo_original>
// kernel: tpu_custom_call.1
$region0: #{tpu_custom_call.1}
  #allocation0 [shape = 'u32[]', space=smem, size = 0x4, offset = 0x4, fixed_abs, tag = 'smem constant byte address 0x4 - core index']
  #allocation1 [shape = 'u32[72,128]{1,0:T(1,128)}', space=vmem, size = 0x9000, scoped, tag = 'internal scratch']
  %s0 = inlined_call_operand.hbm [shape: bf16[2,8,32], index: 0, kind: input, shape index: {}]
  %s1 = inlined_call_operand.hbm [shape: bf16[32,192], index: 1, kind: input, shape index: {}]
  %s2 = inlined_call_operand.hbm [shape: f32[1,192], index: 2, kind: input, shape index: {}]
  %s3 = inlined_call_operand.hbm [shape: bf16[2,4,8,16], index: 3, kind: output, shape index: {0}]
  %s4 = inlined_call_operand.hbm [shape: bf16[2,4,8,16], index: 4, kind: output, shape index: {1}]
  %s5 = inlined_call_operand.hbm [shape: bf16[2,4,8,16], index: 5, kind: output, shape index: {2}]
  %6 = xla_tuple %s3, %s4, %s5
  %s7 = sld [smem:[#allocation0]]
  $region73: #{tpu_custom_call.1} parent=0
    _
  %s9 = ssub.s32 1, %s7
  %s10 = scalar_select 0, %s9, %s7
  $region1: #{tpu_custom_call.1} parent=0
    #allocation2 [shape = 'u8[4096]{0}', space=vmem, size = 0x1000, scoped, tag = 'input window, operand 0']
    #allocation3 [shape = 's32[2]{0}', space=sflag, size = 0x8, scoped, tag = 'scoped memory for tpu_custom_call.1']
    #allocation4 [shape = 's32[2]{0}', space=sflag, size = 0x8, scoped, tag = 'scoped memory for tpu_custom_call.1']
    #allocation5 [shape = 'u8[16384]{0}', space=vmem, size = 0x4000, scoped, tag = 'input window, operand 1, single buffered']
    #allocation6 [shape = 's32[1]{0}', space=sflag, size = 0x4, scoped, tag = 'scoped memory for tpu_custom_call.1']
    #allocation7 [shape = 'u8[1024]{0}', space=vmem, size = 0x400, scoped, tag = 'input window, operand 2, single buffered']
    #allocation8 [shape = 'u8[16384]{0}', space=vmem, size = 0x4000, scoped, tag = 'output window, operand 0']
    #allocation9 [shape = 'u8[16384]{0}', space=vmem, size = 0x4000, scoped, tag = 'output window, operand 1']
    #allocation10 [shape = 's32[2]{0}', space=sflag, size = 0x8, scoped, tag = 'scoped memory for tpu_custom_call.1']
    #allocation11 [shape = 'u8[16384]{0}', space=vmem, size = 0x4000, scoped, tag = 'output window, operand 2']
    %11 = vsyncpa [#allocation3], 0
    %s12 = scalar_lea.sflag [#allocation3], 1
    %13 = vsyncpa %s12, 0
    %14 = vsyncpa [#allocation6], 0
    %15 = vsyncpa [#allocation4], 0
    %s16 = scalar_lea.sflag [#allocation4], 1
    %17 = vsyncpa %s16, 0
    %18 = vsyncpa [#allocation10], 0
    %s19 = scalar_lea.sflag [#allocation10], 1
    %20 = vsyncpa %s19, 0
    loop: start=0, step=1, limit=4
    $region2: #{tpu_custom_call.1} parent=1 // loop_pre_header
      _
    $region3: #{tpu_custom_call.1} parent=1 // loop_header
      %s22 = sphi 0, %s26
      %p23 = scmp.ge.s32.totalorder %s22, 4
      %s29 = sphi 0, %s41
      %s30 = sphi 0, %s37
      %s31 = sphi 0, %s29
      %s32 = sphi 0, %s30
      %s33 = sphi 0, %s31
      %s34 = sphi 0, %s32
      %s46 = sphi 0, %s48
      %s49 = sphi 0, %s46
      %s50 = sphi 0, %s49
      %s66 = sphi 0, %s50
      %s70 = sphi 0, %s70
      %s72 = sphi 0, %s70
      %s73 = sphi 0, %s72
      %s87 = sphi 0, %s73
      %s91 = sphi 0, %s91
      %s93 = sphi 0, %s91
      %s94 = sphi 0, %s93
      %s108 = sphi 0, %s94
      %s116 = sphi 0, %s118
      %s119 = sphi 0, %s116
      %s120 = sphi 0, %s119
      %s136 = sphi 0, %s120
      %s144 = sphi 0, %s146
      %s147 = sphi 0, %s144
      %s148 = sphi 0, %s147
      %s164 = sphi 0, %s148
      %s172 = sphi 0, %s174
      %s175 = sphi 0, %s172
      %s176 = sphi 0, %s175
      %s192 = sphi 0, %s176
    $region4: #{tpu_custom_call.1} parent=1 // loop_header_branch
      %25 = sbr.rel (%p23) target = $region8
    $region5: #{tpu_custom_call.1} parent=1 // loop_body
      %s27 = ssub.s32 %s22, 1
      %s28 = ssub.s32 %s22, 2
      %s35 = sadd.s32 1, %s30
      %p36 = scmp.ge.s32.totalorder %s35, 1
      %s37 = scalar_select %p36, 0, %s35
      %s38 = sadd.s32 1, %s29
      %s39 = scalar_select %p36, %s38, %s29
      %p40 = scmp.ge.s32.totalorder %s39, 2
      %s41 = scalar_select %p40, 0, %s39
      %s42 = ssub.s32 %s29, %s41
      %s43 = ssub.s32 %s30, %s37
      %s44 = sor.u32 %s42, %s43
      %p45 = scmp.eq.s32.totalorder %s44, 0
      %s47 = sadd.s32 %s46, 1
      %s48 = scalar_select %p45, %s46, %s47
      %p51 = pneg %p45
      %p52 = scmp.eq.s32.totalorder %s22, 1
      %p53 = por %p51, %p52
      %p54 = scmp.ne.s32.totalorder %s46, %s49
      %p55 = scmp.eq.s32.totalorder %s22, 0
      %p56 = por %p54, %p55
      %p57 = scmp.ne.s32.totalorder %s46, %s49
      %p58 = scmp.eq.s32.totalorder %s27, 1
      %p59 = por %p57, %p58
      %p60 = scmp.ne.s32.totalorder %s49, %s50
      %p61 = scmp.eq.s32.totalorder %s27, 0
      %p62 = por %p60, %p61
      %p63 = scmp.ne.s32.totalorder %s49, %s50
      %p64 = scmp.eq.s32.totalorder %s28, 1
      %p65 = por %p63, %p64
      %p67 = scmp.ne.s32.totalorder %s50, %s66
      %p68 = scmp.eq.s32.totalorder %s28, 0
      %p69 = por %p67, %p68
      %s71 = sadd.s32 %s70, 1
      %p74 = scmp.eq.s32.totalorder %s22, 1
      %p75 = scmp.ne.s32.totalorder %s70, %s72
      %p76 = scmp.eq.s32.totalorder %s22, 0
      %p77 = por %p75, %p76
      %p78 = scmp.ne.s32.totalorder %s70, %s72
      %p79 = scmp.eq.s32.totalorder %s27, 1
      %p80 = por %p78, %p79
      %p81 = scmp.ne.s32.totalorder %s72, %s73
      %p82 = scmp.eq.s32.totalorder %s27, 0
      %p83 = por %p81, %p82
      %p84 = scmp.ne.s32.totalorder %s72, %s73
      %p85 = scmp.eq.s32.totalorder %s28, 1
      %p86 = por %p84, %p85
      %p88 = scmp.ne.s32.totalorder %s73, %s87
      %p89 = scmp.eq.s32.totalorder %s28, 0
      %p90 = por %p88, %p89
      %s92 = sadd.s32 %s91, 1
      %p95 = scmp.eq.s32.totalorder %s22, 1
      %p96 = scmp.ne.s32.totalorder %s91, %s93
      %p97 = scmp.eq.s32.totalorder %s22, 0
      %p98 = por %p96, %p97
      %p99 = scmp.ne.s32.totalorder %s91, %s93
      %p100 = scmp.eq.s32.totalorder %s27, 1
      %p101 = por %p99, %p100
      %p102 = scmp.ne.s32.totalorder %s93, %s94
      %p103 = scmp.eq.s32.totalorder %s27, 0
      %p104 = por %p102, %p103
      %p105 = scmp.ne.s32.totalorder %s93, %s94
      %p106 = scmp.eq.s32.totalorder %s28, 1
      %p107 = por %p105, %p106
      %p109 = scmp.ne.s32.totalorder %s94, %s108
      %p110 = scmp.eq.s32.totalorder %s28, 0
      %p111 = por %p109, %p110
      %s112 = ssub.s32 %s29, %s41
      %s113 = ssub.s32 %s30, %s37
      %s114 = sor.u32 %s112, %s113
      %p115 = scmp.eq.s32.totalorder %s114, 0
      %s117 = sadd.s32 %s116, 1
      %s118 = scalar_select %p115, %s116, %s117
      %p121 = pneg %p115
      %p122 = scmp.eq.s32.totalorder %s22, 1
      %p123 = por %p121, %p122
      %p124 = scmp.ne.s32.totalorder %s116, %s119
      %p125 = scmp.eq.s32.totalorder %s22, 0
      %p126 = por %p124, %p125
      %p127 = scmp.ne.s32.totalorder %s116, %s119
      %p128 = scmp.eq.s32.totalorder %s27, 1
      %p129 = por %p127, %p128
      %p130 = scmp.ne.s32.totalorder %s119, %s120
      %p131 = scmp.eq.s32.totalorder %s27, 0
      %p132 = por %p130, %p131
      %p133 = scmp.ne.s32.totalorder %s119, %s120
      %p134 = scmp.eq.s32.totalorder %s28, 1
      %p135 = por %p133, %p134
      %p137 = scmp.ne.s32.totalorder %s120, %s136
      %p138 = scmp.eq.s32.totalorder %s28, 0
      %p139 = por %p137, %p138
      %s140 = ssub.s32 %s29, %s41
      %s141 = ssub.s32 %s30, %s37
      %s142 = sor.u32 %s140, %s141
      %p143 = scmp.eq.s32.totalorder %s142, 0
      %s145 = sadd.s32 %s144, 1
      %s146 = scalar_select %p143, %s144, %s145
      %p149 = pneg %p143
      %p150 = scmp.eq.s32.totalorder %s22, 1
      %p151 = por %p149, %p150
      %p152 = scmp.ne.s32.totalorder %s144, %s147
      %p153 = scmp.eq.s32.totalorder %s22, 0
      %p154 = por %p152, %p153
      %p155 = scmp.ne.s32.totalorder %s144, %s147
      %p156 = scmp.eq.s32.totalorder %s27, 1
      %p157 = por %p155, %p156
      %p158 = scmp.ne.s32.totalorder %s147, %s148
      %p159 = scmp.eq.s32.totalorder %s27, 0
      %p160 = por %p158, %p159
      %p161 = scmp.ne.s32.totalorder %s147, %s148
      %p162 = scmp.eq.s32.totalorder %s28, 1
      %p163 = por %p161, %p162
      %p165 = scmp.ne.s32.totalorder %s148, %s164
      %p166 = scmp.eq.s32.totalorder %s28, 0
      %p167 = por %p165, %p166
      %s168 = ssub.s32 %s29, %s41
      %s169 = ssub.s32 %s30, %s37
      %s170 = sor.u32 %s168, %s169
      %p171 = scmp.eq.s32.totalorder %s170, 0
      %s173 = sadd.s32 %s172, 1
      %s174 = scalar_select %p171, %s172, %s173
      %p177 = pneg %p171
      %p178 = scmp.eq.s32.totalorder %s22, 1
      %p179 = por %p177, %p178
      %p180 = scmp.ne.s32.totalorder %s172, %s175
      %p181 = scmp.eq.s32.totalorder %s22, 0
      %p182 = por %p180, %p181
      %p183 = scmp.ne.s32.totalorder %s172, %s175
      %p184 = scmp.eq.s32.totalorder %s27, 1
      %p185 = por %p183, %p184
      %p186 = scmp.ne.s32.totalorder %s175, %s176
      %p187 = scmp.eq.s32.totalorder %s27, 0
      %p188 = por %p186, %p187
      %p189 = scmp.ne.s32.totalorder %s175, %s176
      %p190 = scmp.eq.s32.totalorder %s28, 1
      %p191 = por %p189, %p190
      %p193 = scmp.ne.s32.totalorder %s176, %s192
      %p194 = scmp.eq.s32.totalorder %s28, 0
      %p195 = por %p193, %p194
      %p196 = scmp.le.s32.totalorder 1, %s22
      %p197 = scmp.lt.s32.totalorder %s22, 3
      %p198 = pnand %p196, %p197
      %p199 = pneg %p198
      // Predicated region
      $region9: #{tpu_custom_call.1} parent=5 // pred_check
        _
      $region10: #{tpu_custom_call.1} parent=5 // pred_check_branch
        %201 = sbr.rel (%p198) target = $region12
      $region11: #{tpu_custom_call.1} parent=5 // pred_region
        %s202 = ssub.s32 %s22, 1
        // Predicated region
        $region13: #{tpu_custom_call.1} parent=11 // pred_check
          %p203 = pneg %p83
        $region14: #{tpu_custom_call.1} parent=11 // pred_check_branch
          %205 = sbr.rel (%p203) target = $region16
        $region15: #{tpu_custom_call.1} parent=11 // pred_region
          %207 = vsyncadd [#allocation6], 0
          %s208 = sshll.u32 %s1, 4
          %s209 = int_to_ptr.hbm [resolvable:$true] %s208
          %s210 = sshll.u32 [#allocation5], 4
          %s211 = int_to_ptr.vmem [resolvable:$true] %s210
          %216 = dma.hbm_to_vmem [thread:$0]  %s209, 512, %s211, [#allocation6], 128, 128, 8
        $region16: #{tpu_custom_call.1} parent=11 // pred_fallthru
          _
        // Predicated region
        $region17: #{tpu_custom_call.1} parent=11 // pred_check
          %p217 = pneg %p104
        $region18: #{tpu_custom_call.1} parent=11 // pred_check_branch
          %219 = sbr.rel (%p217) target = $region20
        $region19: #{tpu_custom_call.1} parent=11 // pred_region
          %221 = vsyncadd [#allocation6], 0
          %s223 = sshll.u32 %s2, 4
          %s224 = int_to_ptr.hbm [resolvable:$true] %s223
          %s225 = sshll.u32 [#allocation7], 4
          %s226 = int_to_ptr.vmem [resolvable:$true] %s225
          %228 = dma.hbm_to_vmem [thread:$0]  %s224, 32, %s226, [#allocation6]
        $region20: #{tpu_custom_call.1} parent=11 // pred_fallthru
          _
      $region12: #{tpu_custom_call.1} parent=5 // pred_fallthru
        _
      %p229 = scmp.lt.s32.totalorder %s22, 2
      // Predicated region
      $region21: #{tpu_custom_call.1} parent=5 // pred_check
        %p230 = pneg %p229
      $region22: #{tpu_custom_call.1} parent=5 // pred_check_branch
        %232 = sbr.rel (%p230) target = $region24
      $region23: #{tpu_custom_call.1} parent=5 // pred_region
        // Predicated region
        $region25: #{tpu_custom_call.1} parent=23 // pred_check
          %p233 = pneg %p56
        $region26: #{tpu_custom_call.1} parent=23 // pred_check_branch
          %235 = sbr.rel (%p233) target = $region28
        $region27: #{tpu_custom_call.1} parent=23 // pred_region
          %s236 = sand.u32 %s46, 1
          %s237 = scalar_lea.sflag [#allocation3], %s236
          %s238 = sand.u32 %s46, 1
          %s239 = smul.addr %s238, 4
          %s240 = scalar_lea.vmem [#allocation2], %s239
          %242 = vsyncadd %s237, 0
          %s243 = sadd.s32 %s30, %s29
          %s244 = smul.addr %s243, 4
          %s245 = scalar_lea.hbm %s0, %s244
          %s247 = sshll.u32 %s245, 4
          %s248 = int_to_ptr.hbm [resolvable:$true] %s247
          %s249 = sshll.u32 %s240, 4
          %s250 = int_to_ptr.vmem [resolvable:$true] %s249
          %252 = dma.hbm_to_vmem [thread:$0]  %s248, 64, %s250, %s237
        $region28: #{tpu_custom_call.1} parent=23 // pred_fallthru
          _
      $region24: #{tpu_custom_call.1} parent=5 // pred_fallthru
        _
      %p253 = scmp.le.s32.totalorder 1, %s22
      %p254 = scmp.lt.s32.totalorder %s22, 3
      %p255 = pnand %p253, %p254
      %p256 = pneg %p255
      // Predicated region
      $region29: #{tpu_custom_call.1} parent=5 // pred_check
        _
      $region30: #{tpu_custom_call.1} parent=5 // pred_check_branch
        %258 = sbr.rel (%p255) target = $region32
      $region31: #{tpu_custom_call.1} parent=5 // pred_region
        %s259 = ssub.s32 %s22, 1
        %s260 = sand.u32 %s49, 1
        %s261 = scalar_lea.sflag [#allocation3], %s260
        %s262 = sand.u32 %s49, 1
        %s263 = smul.addr %s262, 4
        %s264 = scalar_lea.vmem [#allocation2], %s263
        // Predicated region
        $region33: #{tpu_custom_call.1} parent=31 // pred_check
          %p265 = pneg %p62
        $region34: #{tpu_custom_call.1} parent=31 // pred_check_branch
          %267 = sbr.rel (%p265) target = $region36
        $region35: #{tpu_custom_call.1} parent=31 // pred_region
          %269 = dma.done %s261, 64
        $region36: #{tpu_custom_call.1} parent=31 // pred_fallthru
          _
        // Predicated region
        $region37: #{tpu_custom_call.1} parent=31 // pred_check
          %p270 = pneg %p83
        $region38: #{tpu_custom_call.1} parent=31 // pred_check_branch
          %272 = sbr.rel (%p270) target = $region40
        $region39: #{tpu_custom_call.1} parent=31 // pred_region
          %274 = dma.done [#allocation6], 512
        $region40: #{tpu_custom_call.1} parent=31 // pred_fallthru
          _
        // Predicated region
        $region41: #{tpu_custom_call.1} parent=31 // pred_check
          %p275 = pneg %p104
        $region42: #{tpu_custom_call.1} parent=31 // pred_check_branch
          %277 = sbr.rel (%p275) target = $region44
        $region43: #{tpu_custom_call.1} parent=31 // pred_region
          %279 = dma.done [#allocation6], 32
        $region44: #{tpu_custom_call.1} parent=31 // pred_fallthru
          _
        %s280 = sand.u32 %s49, 1
        %s281 = scalar_lea.sflag [#allocation3], %s280
        %s282 = sand.u32 %s49, 1
        %s283 = smul.addr %s282, 4
        %s284 = scalar_lea.vmem [#allocation2], %s283
        %p285 = pneg %p62
        %p286 = pneg %p59
        %p287 = pneg %p83
        %p288 = pneg %p80
        %p289 = pneg %p104
        %p290 = pneg %p101
        %p291 = pneg %p132
        %p292 = pneg %p129
        %s293 = sand.u32 %s119, 1
        %s294 = scalar_lea.sflag [#allocation4], %s293
        %s295 = sand.u32 %s119, 1
        %s296 = smul.addr %s295, 16
        %s297 = scalar_lea.vmem [#allocation8], %s296
        %p298 = pneg %p160
        %p299 = pneg %p157
        %s300 = sand.u32 %s27, 1
        %s301 = scalar_lea.sflag [#allocation10], %s300
        %s302 = sand.u32 %s147, 1
        %s303 = smul.addr %s302, 16
        %s304 = scalar_lea.vmem [#allocation9], %s303
        %p305 = pneg %p188
        %p306 = pneg %p185
        %s307 = sand.u32 %s27, 1
        %s308 = scalar_lea.sflag [#allocation10], %s307
        %s309 = sand.u32 %s175, 1
        %s310 = smul.addr %s309, 16
        %s311 = scalar_lea.vmem [#allocation11], %s310
        %v313 = vld [vmem:[%s264] sm:$0xf]
        %v314 = vld [vmem:[#allocation5] sm:$0xff]
        %v315 = vld [vmem:[#allocation5 + $0x8] sm:$0xff]
        %v316 = vld [vmem:[#allocation5 + $0x10] sm:$0xff]
        %v317 = vld [vmem:[#allocation5 + $0x18] sm:$0xff]
        %v318 = vld [vmem:[#allocation7] sm:$0x3]
        %v320 = vperm.slane %v318, 0
        %v321 = vperm.slane %v318, 1
        %v328 = vunpack.c.l.b16 %v314
        %v329 = vunpack.c.h.b16 %v314
        %v330 = vunpack.c.l.b16 %v315
        %v331 = vunpack.c.h.b16 %v315
        %v332 = vunpack.c.l.b16 %v316
        %v333 = vunpack.c.h.b16 %v316
        %v334 = vunpack.c.l.b16 %v317
        %v335 = vunpack.c.h.b16 %v317
        %v336 = vpack.c.b16 %v330, %v328
        %v337 = vpack.c.b16 %v331, %v329
        %v338 = vpack.c.b16 %v334, %v332
        %v339 = vpack.c.b16 %v335, %v333
        %vm344 = vcmask 261120
        %v346 = vsel %vm344, %v313, 0
        %348 = vmatpush.bf16.msra.mxu0 0
        %349 = vmatpush.bf16.msra.mxu0 0
        %350 = vmatpush.bf16.msra.mxu0 0
        %351 = vmatpush.bf16.msra.mxu0 0
        %352 = vmatpush.bf16.msra.mxu0 0
        %353 = vmatpush.bf16.msra.mxu0 0
        %354 = vmatpush.bf16.msra.mxu0 %v338
        %355 = vmatpush.bf16.msra.mxu0 %v336
        %356 = vmatmul.bf16.gmra.mxu0 %v346
        %v357 = vpop.f32.mrf.mxu0
        %v358 = vadd.f32 %v320, %v357
        %v359 = vpop.f32.mrf.mxu0
        %360 = vdwg.mxu0
        %361 = vmatpush.bf16.msra.mxu0 0
        %362 = vmatpush.bf16.msra.mxu0 0
        %363 = vmatpush.bf16.msra.mxu0 0
        %364 = vmatpush.bf16.msra.mxu0 0
        %365 = vmatpush.bf16.msra.mxu0 0
        %366 = vmatpush.bf16.msra.mxu0 0
        %367 = vmatpush.bf16.msra.mxu0 %v339
        %368 = vmatpush.bf16.msra.mxu0 %v337
        %369 = vmatmul.bf16.gmra.mxu0 %v346
        %v370 = vpop.f32.mrf.mxu0
        %v371 = vadd.f32 %v321, %v370
        %v372 = vpop.f32.mrf.mxu0
        %373 = vdwg.mxu0
        %v374 = vpack.c.bf16 %v358, %v358
        %vm375 = vcmask 125952
        %376 = vst.msk [vmem:[%s297] sm:$0xf] %vm375, %v374
        %378 = vrot.lane.b32.xlu0 %v374, 64
        %v379 = vpop.permute.xlu0 %378
        %381 = vst.msk [vmem:[%s304] sm:$0xf] %vm375, %v379
        %v382 = vpack.c.bf16 %v371, %v371
        %383 = vst.msk [vmem:[%s311] sm:$0xf] %vm375, %v382
        %384 = vrot.lane.b32.xlu0 %v374, 112
        %v385 = vpop.permute.xlu0 %384
        %s387 = scalar_lea.vmem %s297, 4 [#allocation8]
        %388 = vst.msk [vmem:[%s387] sm:$0xf] %vm375, %v385
        %389 = vrot.lane.b32.xlu0 %v374, 48
        %v390 = vpop.permute.xlu0 %389
        %s392 = scalar_lea.vmem %s304, 4 [#allocation9]
        %393 = vst.msk [vmem:[%s392] sm:$0xf] %vm375, %v390
        %395 = vrot.lane.b32.xlu0 %v382, 112
        %v396 = vpop.permute.xlu0 %395
        %s398 = scalar_lea.vmem %s311, 4 [#allocation11]
        %399 = vst.msk [vmem:[%s398] sm:$0xf] %vm375, %v396
        %400 = vrot.lane.b32.xlu0 %v374, 96
        %v401 = vpop.permute.xlu0 %400
        %s403 = scalar_lea.vmem %s297, 8 [#allocation8]
        %404 = vst.msk [vmem:[%s403] sm:$0xf] %vm375, %v401
        %405 = vrot.lane.b32.xlu0 %v374, 32
        %v406 = vpop.permute.xlu0 %405
        %s408 = scalar_lea.vmem %s304, 8 [#allocation9]
        %409 = vst.msk [vmem:[%s408] sm:$0xf] %vm375, %v406
        %410 = vrot.lane.b32.xlu0 %v382, 96
        %v411 = vpop.permute.xlu0 %410
        %s413 = scalar_lea.vmem %s311, 8 [#allocation11]
        %414 = vst.msk [vmem:[%s413] sm:$0xf] %vm375, %v411
        %415 = vrot.lane.b32.xlu0 %v374, 80
        %v416 = vpop.permute.xlu0 %415
        %s418 = scalar_lea.vmem %s297, 12 [#allocation8]
        %419 = vst.msk [vmem:[%s418] sm:$0xf] %vm375, %v416
        %420 = vrot.lane.b32.xlu0 %v374, 16
        %v421 = vpop.permute.xlu0 %420
        %s423 = scalar_lea.vmem %s304, 12 [#allocation9]
        %424 = vst.msk [vmem:[%s423] sm:$0xf] %vm375, %v421
        %425 = vrot.lane.b32.xlu0 %v382, 80
        %v426 = vpop.permute.xlu0 %425
        %s428 = scalar_lea.vmem %s311, 12 [#allocation11]
        %429 = vst.msk [vmem:[%s428] sm:$0xf] %vm375, %v426
        %s430 = sand.u32 %s119, 1
        %s431 = scalar_lea.sflag [#allocation4], %s430
        %s432 = sand.u32 %s119, 1
        %s433 = smul.addr %s432, 16
        %s434 = scalar_lea.vmem [#allocation8], %s433
        %s435 = sand.u32 %s27, 1
        %s436 = scalar_lea.sflag [#allocation10], %s435
        %s437 = sand.u32 %s147, 1
        %s438 = smul.addr %s437, 16
        %s439 = scalar_lea.vmem [#allocation9], %s438
        %s440 = sand.u32 %s27, 1
        %s441 = scalar_lea.sflag [#allocation10], %s440
        %s442 = sand.u32 %s175, 1
        %s443 = smul.addr %s442, 16
        %s444 = scalar_lea.vmem [#allocation11], %s443
        // Predicated region
        $region45: #{tpu_custom_call.1} parent=31 // pred_check
          %p445 = pneg %p129
        $region46: #{tpu_custom_call.1} parent=31 // pred_check_branch
          %447 = sbr.rel (%p445) target = $region48
        $region47: #{tpu_custom_call.1} parent=31 // pred_region
          %449 = vsyncadd %s431, 0
          %s450 = smul.addr %s31, 4
          %s451 = sadd.s32 %s32, %s450
          %s452 = smul.addr %s451, 4
          %s453 = scalar_lea.hbm %s3, %s452
          %s454 = sshll.u32 %s434, 4
          %s455 = int_to_ptr.vmem [resolvable:$true] %s454
          %s456 = sshll.u32 %s453, 4
          %s457 = int_to_ptr.hbm [resolvable:$true] %s456
          %462 = dma.vmem_to_hbm [thread:$0]  %s455, 256, %s457, %s431, 64, 64, 4
        $region48: #{tpu_custom_call.1} parent=31 // pred_fallthru
          _
        // Predicated region
        $region49: #{tpu_custom_call.1} parent=31 // pred_check
          %p463 = pneg %p157
        $region50: #{tpu_custom_call.1} parent=31 // pred_check_branch
          %465 = sbr.rel (%p463) target = $region52
        $region51: #{tpu_custom_call.1} parent=31 // pred_region
          %467 = vsyncadd %s436, 0
          %s468 = smul.addr %s31, 4
          %s469 = sadd.s32 %s32, %s468
          %s470 = smul.addr %s469, 4
          %s471 = scalar_lea.hbm %s4, %s470
          %s472 = sshll.u32 %s439, 4
          %s473 = int_to_ptr.vmem [resolvable:$true] %s472
          %s474 = sshll.u32 %s471, 4
          %s475 = int_to_ptr.hbm [resolvable:$true] %s474
          %480 = dma.vmem_to_hbm [thread:$0]  %s473, 256, %s475, %s436, 64, 64, 4
        $region52: #{tpu_custom_call.1} parent=31 // pred_fallthru
          _
        // Predicated region
        $region53: #{tpu_custom_call.1} parent=31 // pred_check
          %p481 = pneg %p185
        $region54: #{tpu_custom_call.1} parent=31 // pred_check_branch
          %483 = sbr.rel (%p481) target = $region56
        $region55: #{tpu_custom_call.1} parent=31 // pred_region
          %485 = vsyncadd %s441, 0
          %s486 = smul.addr %s31, 4
          %s487 = sadd.s32 %s32, %s486
          %s488 = smul.addr %s487, 4
          %s489 = scalar_lea.hbm %s5, %s488
          %s490 = sshll.u32 %s444, 4
          %s491 = int_to_ptr.vmem [resolvable:$true] %s490
          %s492 = sshll.u32 %s489, 4
          %s493 = int_to_ptr.hbm [resolvable:$true] %s492
          %498 = dma.vmem_to_hbm [thread:$0]  %s491, 256, %s493, %s441, 64, 64, 4
        $region56: #{tpu_custom_call.1} parent=31 // pred_fallthru
          _
      $region32: #{tpu_custom_call.1} parent=5 // pred_fallthru
        _
      %p499 = scmp.le.s32.totalorder 2, %s22
      // Predicated region
      $region57: #{tpu_custom_call.1} parent=5 // pred_check
        %p500 = pneg %p499
      $region58: #{tpu_custom_call.1} parent=5 // pred_check_branch
        %502 = sbr.rel (%p500) target = $region60
      $region59: #{tpu_custom_call.1} parent=5 // pred_region
        %s503 = ssub.s32 %s22, 2
        // Predicated region
        $region61: #{tpu_custom_call.1} parent=59 // pred_check
          %p504 = pneg %p135
        $region62: #{tpu_custom_call.1} parent=59 // pred_check_branch
          %506 = sbr.rel (%p504) target = $region64
        $region63: #{tpu_custom_call.1} parent=59 // pred_region
          %s507 = sand.u32 %s120, 1
          %s508 = scalar_lea.sflag [#allocation4], %s507
          %s509 = sand.u32 %s120, 1
          %s510 = smul.addr %s509, 16
          %s511 = scalar_lea.vmem [#allocation8], %s510
          %513 = dma.done %s508, 256
        $region64: #{tpu_custom_call.1} parent=59 // pred_fallthru
          _
        // Predicated region
        $region65: #{tpu_custom_call.1} parent=59 // pred_check
          %p514 = pneg %p163
        $region66: #{tpu_custom_call.1} parent=59 // pred_check_branch
          %516 = sbr.rel (%p514) target = $region68
        $region67: #{tpu_custom_call.1} parent=59 // pred_region
          %s517 = sand.u32 %s28, 1
          %s518 = scalar_lea.sflag [#allocation10], %s517
          %s519 = sand.u32 %s148, 1
          %s520 = smul.addr %s519, 16
          %s521 = scalar_lea.vmem [#allocation9], %s520
          %523 = dma.done %s518, 256
        $region68: #{tpu_custom_call.1} parent=59 // pred_fallthru
          _
        // Predicated region
        $region69: #{tpu_custom_call.1} parent=59 // pred_check
          %p524 = pneg %p191
        $region70: #{tpu_custom_call.1} parent=59 // pred_check_branch
          %526 = sbr.rel (%p524) target = $region72
        $region71: #{tpu_custom_call.1} parent=59 // pred_region
          %s527 = sand.u32 %s28, 1
          %s528 = scalar_lea.sflag [#allocation10], %s527
          %s529 = sand.u32 %s176, 1
          %s530 = smul.addr %s529, 16
          %s531 = scalar_lea.vmem [#allocation11], %s530
          %533 = dma.done %s528, 256
        $region72: #{tpu_custom_call.1} parent=59 // pred_fallthru
          _
      $region60: #{tpu_custom_call.1} parent=5 // pred_fallthru
        _
    $region6: #{tpu_custom_call.1} parent=1 // loop_footer
      %s26 = sadd.s32 1, %s22
    $region7: #{tpu_custom_call.1} parent=1 // loop_footer_branch
      %21 = sbr.rel target = $region3
    $region8: #{tpu_custom_call.1} parent=1 // loop_exit
      _
    %534 = vsyncpa [#allocation3], 1
    %s535 = scalar_lea.sflag [#allocation3], 1
    %536 = vsyncpa %s535, 1
    %537 = vsyncpa [#allocation6], 1
    %538 = vsyncpa [#allocation4], 1
    %s539 = scalar_lea.sflag [#allocation4], 1
    %540 = vsyncpa %s539, 1
    %541 = vsyncpa [#allocation10], 1
    %s542 = scalar_lea.sflag [#allocation10], 1
    %543 = vsyncpa %s542, 1

</llo_original>
